<compile_context>
chip_gen: v7x
topology: tpu7x:2x2x1
jax: 0.10.0
libtpu: 0.0.40
codegen_flags: <defaults>
</compile_context>

<pallas_src>
import functools

import jax
import jax.numpy as jnp
from jax.experimental import pallas as pl
from jax.experimental.pallas import tpu as pltpu


def _round_up(x, m):
    return ((x + m - 1) // m) * m


def _maxmin_kernel(p_ref, pt_ref, o_ref, *, n_points, diag_val):
    # p_ref:  (TM, D)  row tile of points (point[i] for i in this tile)
    # pt_ref: (D, N)   all points, transposed (point[j])
    # o_ref:  (8, 128) per-tile partial: max_i min_j ||p[j]-p[i]||^2 (broadcast)
    tm, d = p_ref.shape
    n = pt_ref.shape[1]
    row0 = pl.program_id(0) * tm

    # Squared pairwise distances for this row tile, built as a D-step VPU FMA
    # chain on lane-dense (TM, N) tiles (D is tiny, so MXU would be <3% utilized).
    d2 = jnp.zeros((tm, n), jnp.float32)
    for k in range(d):
        col = p_ref[:, k : k + 1].astype(jnp.float32)   # (TM, 1)  point[i]_k
        row = pt_ref[k : k + 1, :].astype(jnp.float32)  # (1, N)   point[j]_k
        diff = row - col                                 # (TM, N)
        d2 = d2 + diff * diff

    # In-kernel diagonal mask (replaces the bigeye HBM input). We stay in squared
    # space, so the mask value is max_v**2 (sqrt of it recovers torch's max_v,
    # preserving the degenerate N==1 answer).
    row_ids = row0 + jax.lax.broadcasted_iota(jnp.int32, (tm, n), 0)
    col_ids = jax.lax.broadcasted_iota(jnp.int32, (tm, n), 1)
    d2 = jnp.where(row_ids == col_ids, jnp.float32(diag_val), d2)

    min_d2 = jnp.min(d2, axis=1, keepdims=True)          # (TM, 1): min over j

    # Rows beyond the real point count (padded last tile reads OOB garbage)
    # must never win the max: squared distances are >= 0, so -1 is safe.
    valid = (row0 + jax.lax.broadcasted_iota(jnp.int32, (tm, 1), 0)) < n_points
    min_d2 = jnp.where(valid, min_d2, jnp.float32(-1.0))

    partial = jnp.max(min_d2)                             # scalar for this tile
    # Lane-dense, unmasked store of the partial (broadcast over the block).
    o_ref[...] = jnp.full(o_ref.shape, partial, jnp.float32)


def max_min_point_dist(point, max_v=100000.0, tm=None):
    """point: [point_num, dim] array. Returns shape (1,) float32 (matches torch)."""
    point = point.astype(jnp.float32)
    n, d = point.shape

    if tm is None:
        # Biggest row tile up to 512 that still covers N (keeps a few (TM, N)
        # f32 temps comfortably inside VMEM on all generations).
        tm = max(8, min(512, _round_up(n, 8)))
    tm = _round_up(min(tm, _round_up(n, 8)), 8)
    num_tiles = (n + tm - 1) // tm

    point_t = point.T  # (D, N) — plain-JAX transpose outside the kernel

    diag_val = float(max_v) * float(max_v)
    kernel = functools.partial(_maxmin_kernel, n_points=n, diag_val=diag_val)

    # Rough VMEM budget: a few live (TM, N) f32 temps + double-buffered inputs.
    est = 6 * tm * n * 4 + 4 * (tm * d + d * n) * 4 + 2 * 8 * 128 * 4
    vmem_limit = int(min(64 * 2**20, max(16 * 2**20, 2 * est)))

    partials = pl.pallas_call(
        kernel,
        out_shape=jax.ShapeDtypeStruct((num_tiles * 8, 128), jnp.float32),
        grid_spec=pltpu.PrefetchScalarGridSpec(
            num_scalar_prefetch=0,
            grid=(num_tiles,),
            in_specs=[
                pl.BlockSpec((tm, d), lambda i: (i, 0)),   # row tile of points
                pl.BlockSpec((d, n), lambda i: (0, 0)),    # all points, resident
            ],
            out_specs=pl.BlockSpec((8, 128), lambda i: (i, 0)),
        ),
        compiler_params=pltpu.CompilerParams(
            dimension_semantics=("parallel",),   # independent row tiles -> megacore
            vmem_limit_bytes=vmem_limit,
        ),
    )(point, point_t)

    # Single deferred sqrt of the global max-of-mins (sqrt is monotone).
    return jnp.sqrt(jnp.max(partials)).reshape((1,))


def _reference(point, max_v=100000.0):
    point = point.astype(jnp.float32)
    n = point.shape[0]
    diff = point[None, :, :] - point[:, None, :]          # diff[i, j] = p[j] - p[i]
    dist = jnp.sqrt(jnp.sum(diff * diff, axis=-1)) + jnp.eye(n, dtype=jnp.float32) * max_v
    return jnp.max(jnp.min(dist, axis=1), axis=0, keepdims=True)


if __name__ == "__main__":
    key = jax.random.PRNGKey(0)

    # Case 1: the module's natural shape (point_num=128, dim=3), single tile.
    point = jax.random.normal(key, (128, 3), dtype=jnp.float32)
    out = jax.block_until_ready(max_min_point_dist(point))
    ref = _reference(point)
    assert out.shape == (1,), out.shape
    assert jnp.allclose(out, ref, rtol=1e-5, atol=1e-5), (out, ref)

    # Case 2: non-multiple-of-tile N with explicit small TM -> exercises the
    # multi-tile grid and the padded-row masking path.
    point2 = jax.random.normal(jax.random.PRNGKey(1), (100, 3), dtype=jnp.float32)
    out2 = jax.block_until_ready(max_min_point_dist(point2, tm=64))
    ref2 = _reference(point2)
    assert out2.shape == (1,), out2.shape
    assert jnp.allclose(out2, ref2, rtol=1e-5, atol=1e-5), (out2, ref2)

    print("KERNEL_OK")
</pallas_src>

<mosaic_0001>
module attributes {stable_mosaic.version = 11 : i64} {
  func.func @_maxmin_kernel(%arg0: i32, %arg1: memref<128x3xf32, #tpu.memory_space<vmem>>, %arg2: memref<3x128xf32, #tpu.memory_space<vmem>>, %arg3: memref<8x128xf32, #tpu.memory_space<vmem>>) attributes {dimension_semantics = [#tpu.dimension_semantics<parallel>], iteration_bounds = array<i64: 1>, scalar_prefetch = 0 : i64, scratch_operands = 0 : i64, tpu.core_type = #tpu.core_type<tc>, window_params = [{transform_indices = @transform_0, window_bounds = array<i64: 128, 3>}, {pipeline_mode = #tpu.pipeline_mode<synchronous>, transform_indices = @transform_1, window_bounds = array<i64: 3, 128>}, {transform_indices = @transform_2, window_bounds = array<i64: 8, 128>}]} {
    %c128_i32 = arith.constant 128 : i32
    %0 = arith.muli %arg0, %c128_i32 : i32
    %cst = arith.constant 0.000000e+00 : f32
    %1 = vector.broadcast %cst : f32 to vector<128x128xf32>
    %c0 = arith.constant 0 : index
    %c0_0 = arith.constant 0 : index
    %2 = vector.load %arg1[%c0, %c0_0] : memref<128x3xf32, #tpu.memory_space<vmem>>, vector<128x1xf32>
    %c0_1 = arith.constant 0 : index
    %c0_2 = arith.constant 0 : index
    %3 = vector.load %arg2[%c0_1, %c0_2] : memref<3x128xf32, #tpu.memory_space<vmem>>, vector<1x128xf32>
    %4 = vector.broadcast %3 : vector<1x128xf32> to vector<128x128xf32>
    %5 = vector.broadcast %2 : vector<128x1xf32> to vector<128x128xf32>
    %6 = arith.subf %4, %5 : vector<128x128xf32>
    %7 = arith.mulf %6, %6 : vector<128x128xf32>
    %8 = arith.addf %1, %7 : vector<128x128xf32>
    %c0_3 = arith.constant 0 : index
    %c1 = arith.constant 1 : index
    %9 = vector.load %arg1[%c0_3, %c1] : memref<128x3xf32, #tpu.memory_space<vmem>>, vector<128x1xf32>
    %c1_4 = arith.constant 1 : index
    %c0_5 = arith.constant 0 : index
    %10 = vector.load %arg2[%c1_4, %c0_5] : memref<3x128xf32, #tpu.memory_space<vmem>>, vector<1x128xf32>
    %11 = vector.broadcast %10 : vector<1x128xf32> to vector<128x128xf32>
    %12 = vector.broadcast %9 : vector<128x1xf32> to vector<128x128xf32>
    %13 = arith.subf %11, %12 : vector<128x128xf32>
    %14 = arith.mulf %13, %13 : vector<128x128xf32>
    %15 = arith.addf %8, %14 : vector<128x128xf32>
    %c0_6 = arith.constant 0 : index
    %c2 = arith.constant 2 : index
    %16 = vector.load %arg1[%c0_6, %c2] : memref<128x3xf32, #tpu.memory_space<vmem>>, vector<128x1xf32>
    %c2_7 = arith.constant 2 : index
    %c0_8 = arith.constant 0 : index
    %17 = vector.load %arg2[%c2_7, %c0_8] : memref<3x128xf32, #tpu.memory_space<vmem>>, vector<1x128xf32>
    %18 = vector.broadcast %17 : vector<1x128xf32> to vector<128x128xf32>
    %19 = vector.broadcast %16 : vector<128x1xf32> to vector<128x128xf32>
    %20 = arith.subf %18, %19 : vector<128x128xf32>
    %21 = arith.mulf %20, %20 : vector<128x128xf32>
    %22 = arith.addf %15, %21 : vector<128x128xf32>
    %23 = tpu.iota {dimensions = array<i32: 0>} : vector<128x128xi32>
    %24 = vector.broadcast %0 : i32 to vector<128x128xi32>
    %25 = arith.addi %24, %23 : vector<128x128xi32>
    %26 = tpu.iota {dimensions = array<i32: 1>} : vector<128x128xi32>
    %27 = arith.cmpi eq, %25, %26 : vector<128x128xi32>
    %cst_9 = arith.constant 1.000000e+10 : f32
    %28 = vector.broadcast %cst_9 : f32 to vector<128x128xf32>
    %29 = arith.select %27, %28, %22 : vector<128x128xi1>, vector<128x128xf32>
    %cst_10 = arith.constant dense<0x7F800000> : vector<128xf32>
    %30 = vector.multi_reduction <minimumf>, %29, %cst_10 [1] : vector<128x128xf32> to vector<128xf32>
    %31 = vector.shape_cast %30 : vector<128xf32> to vector<128x1xf32>
    %32 = tpu.iota {dimensions = array<i32: 0>} : vector<128x1xi32>
    %33 = vector.broadcast %0 : i32 to vector<128x1xi32>
    %34 = arith.addi %33, %32 : vector<128x1xi32>
    %c128_i32_11 = arith.constant 128 : i32
    %35 = vector.broadcast %c128_i32_11 : i32 to vector<128x1xi32>
    %36 = arith.cmpi slt, %34, %35 : vector<128x1xi32>
    %cst_12 = arith.constant -1.000000e+00 : f32
    %37 = vector.broadcast %cst_12 : f32 to vector<128x1xf32>
    %38 = arith.select %36, %31, %37 : vector<128x1xi1>, vector<128x1xf32>
    %39 = vector.shape_cast %38 : vector<128x1xf32> to vector<1x128x1xf32>
    %cst_13 = arith.constant dense<0xFF800000> : vector<1xf32>
    %40 = vector.multi_reduction <maximumf>, %39, %cst_13 [1, 2] : vector<1x128x1xf32> to vector<1xf32>
    %41 = vector.shape_cast %40 : vector<1xf32> to vector<1x1x1xf32>
    %42 = vector.extract %41[0, 0, 0] : f32 from vector<1x1x1xf32>
    %43 = vector.broadcast %42 : f32 to vector<8x128xf32>
    %c0_14 = arith.constant 0 : index
    %c0_15 = arith.constant 0 : index
    %44 = vector.load %arg3[%c0_14, %c0_15] : memref<8x128xf32, #tpu.memory_space<vmem>>, vector<8x128xf32>
    tpu.vector_store %arg3[%c0_14, %c0_15], %43 {strides = array<i32>} : memref<8x128xf32, #tpu.memory_space<vmem>>, vector<8x128xf32>,
    return
  }
  func.func @transform_0(%arg0: i32) -> (i32, i32) {
    %c0_i32 = arith.constant 0 : i32
    %c0_i32_0 = arith.constant 0 : i32
    return %arg0, %c0_i32 : i32, i32
  }
  func.func @transform_1(%arg0: i32) -> (i32, i32) {
    %c0_i32 = arith.constant 0 : i32
    %c0_i32_0 = arith.constant 0 : i32
    %c0_i32_1 = arith.constant 0 : i32
    return %c0_i32, %c0_i32_0 : i32, i32
  }
  func.func @transform_2(%arg0: i32) -> (i32, i32) {
    %c0_i32 = arith.constant 0 : i32
    %c0_i32_0 = arith.constant 0 : i32
    return %arg0, %c0_i32 : i32, i32
  }
}

</mosaic_0001>

<llo_original>
// kernel: tpu_custom_call.1
$region0: #{tpu_custom_call.1}
  #allocation0 [shape = 'u32[]', space=smem, size = 0x4, offset = 0x4, fixed_abs, tag = 'smem constant byte address 0x4 - core index']
  #allocation1 [shape = 'u32[144,128]{1,0:T(1,128)}', space=vmem, size = 0x12000, scoped, tag = 'internal scratch']
  %s0 = inlined_call_operand.vmem [shape: f32[128,3], index: 0, kind: input, shape index: {}]
  %s1 = inlined_call_operand.vmem [shape: f32[3,128], index: 1, kind: input, shape index: {}]
  %s2 = inlined_call_operand.hbm [shape: f32[8,128], index: 2, kind: output, shape index: {}]
  %s3 = sld [smem:[#allocation0]]
  $region18: #{tpu_custom_call.1} parent=0
    _
  %s5 = ssub.s32 1, %s3
  %s6 = scalar_select 0, %s5, %s3
  $region1: #{tpu_custom_call.1} parent=0
    #allocation2 [shape = 'u8[4096]{0}', space=vmem, size = 0x1000, scoped, tag = 'output window, operand 0, single buffered']
    #allocation3 [shape = 's32[1]{0}', space=sflag, size = 0x4, scoped, tag = 'scoped memory for tpu_custom_call.1']
    %7 = vsyncpa [#allocation3], 0
    // Predicated region
    $region2: #{tpu_custom_call.1} parent=1 // pred_check
      _
    $region3: #{tpu_custom_call.1} parent=1 // pred_check_branch
      %9 = sbr.rel (0) target = $region5
    $region4: #{tpu_custom_call.1} parent=1 // pred_region
      _
    $region5: #{tpu_custom_call.1} parent=1 // pred_fallthru
      _
    // Predicated region
    $region6: #{tpu_custom_call.1} parent=1 // pred_check
      _
    $region7: #{tpu_custom_call.1} parent=1 // pred_check_branch
      %11 = sbr.rel (0) target = $region9
    $region8: #{tpu_custom_call.1} parent=1 // pred_region
      _
    $region9: #{tpu_custom_call.1} parent=1 // pred_fallthru
      _
    %s12 = smul.u32 0, 128
    %v13 = vld [vmem:[%s0] sm:$0xff]
    %v14 = vld [vmem:[%s0 + $0x8] sm:$0xff]
    %v15 = vld [vmem:[%s0 + $0x10] sm:$0xff]
    %v16 = vld [vmem:[%s0 + $0x18] sm:$0xff]
    %v17 = vld [vmem:[%s0 + $0x20] sm:$0xff]
    %v18 = vld [vmem:[%s0 + $0x28] sm:$0xff]
    %v19 = vld [vmem:[%s0 + $0x30] sm:$0xff]
    %v20 = vld [vmem:[%s0 + $0x38] sm:$0xff]
    %v21 = vld [vmem:[%s0 + $0x40] sm:$0xff]
    %v22 = vld [vmem:[%s0 + $0x48] sm:$0xff]
    %v23 = vld [vmem:[%s0 + $0x50] sm:$0xff]
    %v24 = vld [vmem:[%s0 + $0x58] sm:$0xff]
    %v25 = vld [vmem:[%s0 + $0x60] sm:$0xff]
    %v26 = vld [vmem:[%s0 + $0x68] sm:$0xff]
    %v27 = vld [vmem:[%s0 + $0x70] sm:$0xff]
    %v28 = vld [vmem:[%s0 + $0x78] sm:$0xff]
    %v29 = vld [vmem:[%s1] sm:$0x1]
    %v30 = vlaneseq
    %v31 = vshrl.u32 %v30, 7
    %v32 = vsub.s32 0, %v31
    %v33 = vrot.slane %v29, %v32
    %35 = vset.pattern.permute.xlu0 0
    %36 = vperm.xlu0 %35, %v13
    %v37 = vpop.permute.xlu0 %36
    %40 = vset.pattern.permute.xlu0 0
    %41 = vperm.xlu0 %40, %v14
    %v42 = vpop.permute.xlu0 %41
    %45 = vset.pattern.permute.xlu0 0
    %46 = vperm.xlu0 %45, %v15
    %v47 = vpop.permute.xlu0 %46
    %50 = vset.pattern.permute.xlu0 0
    %51 = vperm.xlu0 %50, %v16
    %v52 = vpop.permute.xlu0 %51
    %55 = vset.pattern.permute.xlu0 0
    %56 = vperm.xlu0 %55, %v17
    %v57 = vpop.permute.xlu0 %56
    %60 = vset.pattern.permute.xlu0 0
    %61 = vperm.xlu0 %60, %v18
    %v62 = vpop.permute.xlu0 %61
    %65 = vset.pattern.permute.xlu0 0
    %66 = vperm.xlu0 %65, %v19
    %v67 = vpop.permute.xlu0 %66
    %70 = vset.pattern.permute.xlu0 0
    %71 = vperm.xlu0 %70, %v20
    %v72 = vpop.permute.xlu0 %71
    %75 = vset.pattern.permute.xlu0 0
    %76 = vperm.xlu0 %75, %v21
    %v77 = vpop.permute.xlu0 %76
    %80 = vset.pattern.permute.xlu0 0
    %81 = vperm.xlu0 %80, %v22
    %v82 = vpop.permute.xlu0 %81
    %85 = vset.pattern.permute.xlu0 0
    %86 = vperm.xlu0 %85, %v23
    %v87 = vpop.permute.xlu0 %86
    %90 = vset.pattern.permute.xlu0 0
    %91 = vperm.xlu0 %90, %v24
    %v92 = vpop.permute.xlu0 %91
    %95 = vset.pattern.permute.xlu0 0
    %96 = vperm.xlu0 %95, %v25
    %v97 = vpop.permute.xlu0 %96
    %100 = vset.pattern.permute.xlu0 0
    %101 = vperm.xlu0 %100, %v26
    %v102 = vpop.permute.xlu0 %101
    %105 = vset.pattern.permute.xlu0 0
    %106 = vperm.xlu0 %105, %v27
    %v107 = vpop.permute.xlu0 %106
    %110 = vset.pattern.permute.xlu0 0
    %111 = vperm.xlu0 %110, %v28
    %v112 = vpop.permute.xlu0 %111
    %v114 = vsub.f32 %v33, %v37
    %v115 = vsub.f32 %v33, %v42
    %v116 = vsub.f32 %v33, %v47
    %v117 = vsub.f32 %v33, %v52
    %v118 = vsub.f32 %v33, %v57
    %v119 = vsub.f32 %v33, %v62
    %v120 = vsub.f32 %v33, %v67
    %v121 = vsub.f32 %v33, %v72
    %v122 = vsub.f32 %v33, %v77
    %v123 = vsub.f32 %v33, %v82
    %v124 = vsub.f32 %v33, %v87
    %v125 = vsub.f32 %v33, %v92
    %v126 = vsub.f32 %v33, %v97
    %v127 = vsub.f32 %v33, %v102
    %v128 = vsub.f32 %v33, %v107
    %v129 = vsub.f32 %v33, %v112
    %v130 = vmul.f32 %v114, %v114
    %v131 = vmul.f32 %v115, %v115
    %v132 = vmul.f32 %v116, %v116
    %v133 = vmul.f32 %v117, %v117
    %v134 = vmul.f32 %v118, %v118
    %v135 = vmul.f32 %v119, %v119
    %v136 = vmul.f32 %v120, %v120
    %v137 = vmul.f32 %v121, %v121
    %v138 = vmul.f32 %v122, %v122
    %v139 = vmul.f32 %v123, %v123
    %v140 = vmul.f32 %v124, %v124
    %v141 = vmul.f32 %v125, %v125
    %v142 = vmul.f32 %v126, %v126
    %v143 = vmul.f32 %v127, %v127
    %v144 = vmul.f32 %v128, %v128
    %v145 = vmul.f32 %v129, %v129
    %v146 = vadd.f32 %v130, 0.0
    %v147 = vadd.f32 %v131, 0.0
    %v148 = vadd.f32 %v132, 0.0
    %v149 = vadd.f32 %v133, 0.0
    %v150 = vadd.f32 %v134, 0.0
    %v151 = vadd.f32 %v135, 0.0
    %v152 = vadd.f32 %v136, 0.0
    %v153 = vadd.f32 %v137, 0.0
    %v154 = vadd.f32 %v138, 0.0
    %v155 = vadd.f32 %v139, 0.0
    %v156 = vadd.f32 %v140, 0.0
    %v157 = vadd.f32 %v141, 0.0
    %v158 = vadd.f32 %v142, 0.0
    %v159 = vadd.f32 %v143, 0.0
    %v160 = vadd.f32 %v144, 0.0
    %v161 = vadd.f32 %v145, 0.0
    %v162 = vld [vmem:[%s1 + $0x1] sm:$0x1]
    %v163 = vlaneseq
    %v164 = vshrl.u32 %v163, 7
    %v165 = vsub.s32 0, %v164
    %v166 = vrot.slane %v162, %v165
    %167 = vset.pattern.permute.xlu0 1
    %168 = vperm.xlu0 %167, %v13
    %v169 = vpop.permute.xlu0 %168
    %171 = vset.pattern.permute.xlu0 1
    %172 = vperm.xlu0 %171, %v14
    %v173 = vpop.permute.xlu0 %172
    %175 = vset.pattern.permute.xlu0 1
    %176 = vperm.xlu0 %175, %v15
    %v177 = vpop.permute.xlu0 %176
    %179 = vset.pattern.permute.xlu0 1
    %180 = vperm.xlu0 %179, %v16
    %v181 = vpop.permute.xlu0 %180
    %183 = vset.pattern.permute.xlu0 1
    %184 = vperm.xlu0 %183, %v17
    %v185 = vpop.permute.xlu0 %184
    %187 = vset.pattern.permute.xlu0 1
    %188 = vperm.xlu0 %187, %v18
    %v189 = vpop.permute.xlu0 %188
    %191 = vset.pattern.permute.xlu0 1
    %192 = vperm.xlu0 %191, %v19
    %v193 = vpop.permute.xlu0 %192
    %195 = vset.pattern.permute.xlu0 1
    %196 = vperm.xlu0 %195, %v20
    %v197 = vpop.permute.xlu0 %196
    %199 = vset.pattern.permute.xlu0 1
    %200 = vperm.xlu0 %199, %v21
    %v201 = vpop.permute.xlu0 %200
    %203 = vset.pattern.permute.xlu0 1
    %204 = vperm.xlu0 %203, %v22
    %v205 = vpop.permute.xlu0 %204
    %207 = vset.pattern.permute.xlu0 1
    %208 = vperm.xlu0 %207, %v23
    %v209 = vpop.permute.xlu0 %208
    %211 = vset.pattern.permute.xlu0 1
    %212 = vperm.xlu0 %211, %v24
    %v213 = vpop.permute.xlu0 %212
    %215 = vset.pattern.permute.xlu0 1
    %216 = vperm.xlu0 %215, %v25
    %v217 = vpop.permute.xlu0 %216
    %219 = vset.pattern.permute.xlu0 1
    %220 = vperm.xlu0 %219, %v26
    %v221 = vpop.permute.xlu0 %220
    %223 = vset.pattern.permute.xlu0 1
    %224 = vperm.xlu0 %223, %v27
    %v225 = vpop.permute.xlu0 %224
    %227 = vset.pattern.permute.xlu0 1
    %228 = vperm.xlu0 %227, %v28
    %v229 = vpop.permute.xlu0 %228
    %v231 = vsub.f32 %v166, %v169
    %v232 = vsub.f32 %v166, %v173
    %v233 = vsub.f32 %v166, %v177
    %v234 = vsub.f32 %v166, %v181
    %v235 = vsub.f32 %v166, %v185
    %v236 = vsub.f32 %v166, %v189
    %v237 = vsub.f32 %v166, %v193
    %v238 = vsub.f32 %v166, %v197
    %v239 = vsub.f32 %v166, %v201
    %v240 = vsub.f32 %v166, %v205
    %v241 = vsub.f32 %v166, %v209
    %v242 = vsub.f32 %v166, %v213
    %v243 = vsub.f32 %v166, %v217
    %v244 = vsub.f32 %v166, %v221
    %v245 = vsub.f32 %v166, %v225
    %v246 = vsub.f32 %v166, %v229
    %v247 = vmul.f32 %v231, %v231
    %v248 = vmul.f32 %v232, %v232
    %v249 = vmul.f32 %v233, %v233
    %v250 = vmul.f32 %v234, %v234
    %v251 = vmul.f32 %v235, %v235
    %v252 = vmul.f32 %v236, %v236
    %v253 = vmul.f32 %v237, %v237
    %v254 = vmul.f32 %v238, %v238
    %v255 = vmul.f32 %v239, %v239
    %v256 = vmul.f32 %v240, %v240
    %v257 = vmul.f32 %v241, %v241
    %v258 = vmul.f32 %v242, %v242
    %v259 = vmul.f32 %v243, %v243
    %v260 = vmul.f32 %v244, %v244
    %v261 = vmul.f32 %v245, %v245
    %v262 = vmul.f32 %v246, %v246
    %v263 = vadd.f32 %v146, %v247
    %v264 = vadd.f32 %v147, %v248
    %v265 = vadd.f32 %v148, %v249
    %v266 = vadd.f32 %v149, %v250
    %v267 = vadd.f32 %v150, %v251
    %v268 = vadd.f32 %v151, %v252
    %v269 = vadd.f32 %v152, %v253
    %v270 = vadd.f32 %v153, %v254
    %v271 = vadd.f32 %v154, %v255
    %v272 = vadd.f32 %v155, %v256
    %v273 = vadd.f32 %v156, %v257
    %v274 = vadd.f32 %v157, %v258
    %v275 = vadd.f32 %v158, %v259
    %v276 = vadd.f32 %v159, %v260
    %v277 = vadd.f32 %v160, %v261
    %v278 = vadd.f32 %v161, %v262
    %v279 = vld [vmem:[%s1 + $0x2] sm:$0x1]
    %v280 = vlaneseq
    %v281 = vshrl.u32 %v280, 7
    %v282 = vsub.s32 0, %v281
    %v283 = vrot.slane %v279, %v282
    %284 = vset.pattern.permute.xlu0 2
    %285 = vperm.xlu0 %284, %v13
    %v286 = vpop.permute.xlu0 %285
    %288 = vset.pattern.permute.xlu0 2
    %289 = vperm.xlu0 %288, %v14
    %v290 = vpop.permute.xlu0 %289
    %292 = vset.pattern.permute.xlu0 2
    %293 = vperm.xlu0 %292, %v15
    %v294 = vpop.permute.xlu0 %293
    %296 = vset.pattern.permute.xlu0 2
    %297 = vperm.xlu0 %296, %v16
    %v298 = vpop.permute.xlu0 %297
    %300 = vset.pattern.permute.xlu0 2
    %301 = vperm.xlu0 %300, %v17
    %v302 = vpop.permute.xlu0 %301
    %304 = vset.pattern.permute.xlu0 2
    %305 = vperm.xlu0 %304, %v18
    %v306 = vpop.permute.xlu0 %305
    %308 = vset.pattern.permute.xlu0 2
    %309 = vperm.xlu0 %308, %v19
    %v310 = vpop.permute.xlu0 %309
    %312 = vset.pattern.permute.xlu0 2
    %313 = vperm.xlu0 %312, %v20
    %v314 = vpop.permute.xlu0 %313
    %316 = vset.pattern.permute.xlu0 2
    %317 = vperm.xlu0 %316, %v21
    %v318 = vpop.permute.xlu0 %317
    %320 = vset.pattern.permute.xlu0 2
    %321 = vperm.xlu0 %320, %v22
    %v322 = vpop.permute.xlu0 %321
    %324 = vset.pattern.permute.xlu0 2
    %325 = vperm.xlu0 %324, %v23
    %v326 = vpop.permute.xlu0 %325
    %328 = vset.pattern.permute.xlu0 2
    %329 = vperm.xlu0 %328, %v24
    %v330 = vpop.permute.xlu0 %329
    %332 = vset.pattern.permute.xlu0 2
    %333 = vperm.xlu0 %332, %v25
    %v334 = vpop.permute.xlu0 %333
    %336 = vset.pattern.permute.xlu0 2
    %337 = vperm.xlu0 %336, %v26
    %v338 = vpop.permute.xlu0 %337
    %340 = vset.pattern.permute.xlu0 2
    %341 = vperm.xlu0 %340, %v27
    %v342 = vpop.permute.xlu0 %341
    %344 = vset.pattern.permute.xlu0 2
    %345 = vperm.xlu0 %344, %v28
    %v346 = vpop.permute.xlu0 %345
    %v348 = vsub.f32 %v283, %v286
    %v349 = vsub.f32 %v283, %v290
    %v350 = vsub.f32 %v283, %v294
    %v351 = vsub.f32 %v283, %v298
    %v352 = vsub.f32 %v283, %v302
    %v353 = vsub.f32 %v283, %v306
    %v354 = vsub.f32 %v283, %v310
    %v355 = vsub.f32 %v283, %v314
    %v356 = vsub.f32 %v283, %v318
    %v357 = vsub.f32 %v283, %v322
    %v358 = vsub.f32 %v283, %v326
    %v359 = vsub.f32 %v283, %v330
    %v360 = vsub.f32 %v283, %v334
    %v361 = vsub.f32 %v283, %v338
    %v362 = vsub.f32 %v283, %v342
    %v363 = vsub.f32 %v283, %v346
    %v364 = vmul.f32 %v348, %v348
    %v365 = vmul.f32 %v349, %v349
    %v366 = vmul.f32 %v350, %v350
    %v367 = vmul.f32 %v351, %v351
    %v368 = vmul.f32 %v352, %v352
    %v369 = vmul.f32 %v353, %v353
    %v370 = vmul.f32 %v354, %v354
    %v371 = vmul.f32 %v355, %v355
    %v372 = vmul.f32 %v356, %v356
    %v373 = vmul.f32 %v357, %v357
    %v374 = vmul.f32 %v358, %v358
    %v375 = vmul.f32 %v359, %v359
    %v376 = vmul.f32 %v360, %v360
    %v377 = vmul.f32 %v361, %v361
    %v378 = vmul.f32 %v362, %v362
    %v379 = vmul.f32 %v363, %v363
    %v380 = vadd.f32 %v263, %v364
    %v381 = vadd.f32 %v264, %v365
    %v382 = vadd.f32 %v265, %v366
    %v383 = vadd.f32 %v266, %v367
    %v384 = vadd.f32 %v267, %v368
    %v385 = vadd.f32 %v268, %v369
    %v386 = vadd.f32 %v269, %v370
    %v387 = vadd.f32 %v270, %v371
    %v388 = vadd.f32 %v271, %v372
    %v389 = vadd.f32 %v272, %v373
    %v390 = vadd.f32 %v273, %v374
    %v391 = vadd.f32 %v274, %v375
    %v392 = vadd.f32 %v275, %v376
    %v393 = vadd.f32 %v276, %v377
    %v394 = vadd.f32 %v277, %v378
    %v395 = vadd.f32 %v278, %v379
    %v396 = vlaneseq
    %v397 = vshrl.u32 %v396, 7
    %v398 = vadd.s32 %v397, 8
    %v399 = vadd.s32 %v397, 16
    %v400 = vadd.s32 %v397, 24
    %v401 = vadd.s32 %v397, 32
    %v402 = vadd.s32 %v397, 40
    %v403 = vadd.s32 %v397, 48
    %v404 = vadd.s32 %v397, 56
    %v405 = vadd.s32 %v397, 64
    %v406 = vadd.s32 %v397, 72
    %v407 = vadd.s32 %v397, 80
    %v408 = vadd.s32 %v397, 88
    %v409 = vadd.s32 %v397, 96
    %v410 = vadd.s32 %v397, 104
    %v411 = vadd.s32 %v397, 112
    %v412 = vadd.s32 %v397, 120
    %v413 = vstv %s12
    %v414 = vadd.s32 %v413, %v397
    %v415 = vadd.s32 %v413, %v398
    %v416 = vadd.s32 %v413, %v399
    %v417 = vadd.s32 %v413, %v400
    %v418 = vadd.s32 %v413, %v401
    %v419 = vadd.s32 %v413, %v402
    %v420 = vadd.s32 %v413, %v403
    %v421 = vadd.s32 %v413, %v404
    %v422 = vadd.s32 %v413, %v405
    %v423 = vadd.s32 %v413, %v406
    %v424 = vadd.s32 %v413, %v407
    %v425 = vadd.s32 %v413, %v408
    %v426 = vadd.s32 %v413, %v409
    %v427 = vadd.s32 %v413, %v410
    %v428 = vadd.s32 %v413, %v411
    %v429 = vadd.s32 %v413, %v412
    %v430 = vlaneseq
    %v431 = vand.u32 %v430, 127
    %vm432 = vcmp.eq.s32.totalorder %v414, %v431
    %vm433 = vcmp.eq.s32.totalorder %v415, %v431
    %vm434 = vcmp.eq.s32.totalorder %v416, %v431
    %vm435 = vcmp.eq.s32.totalorder %v417, %v431
    %vm436 = vcmp.eq.s32.totalorder %v418, %v431
    %vm437 = vcmp.eq.s32.totalorder %v419, %v431
    %vm438 = vcmp.eq.s32.totalorder %v420, %v431
    %vm439 = vcmp.eq.s32.totalorder %v421, %v431
    %vm440 = vcmp.eq.s32.totalorder %v422, %v431
    %vm441 = vcmp.eq.s32.totalorder %v423, %v431
    %vm442 = vcmp.eq.s32.totalorder %v424, %v431
    %vm443 = vcmp.eq.s32.totalorder %v425, %v431
    %vm444 = vcmp.eq.s32.totalorder %v426, %v431
    %vm445 = vcmp.eq.s32.totalorder %v427, %v431
    %vm446 = vcmp.eq.s32.totalorder %v428, %v431
    %vm447 = vcmp.eq.s32.totalorder %v429, %v431
    %v448 = vsel %vm432, 1e+10, %v380
    %v449 = vsel %vm433, 1e+10, %v381
    %v450 = vsel %vm434, 1e+10, %v382
    %v451 = vsel %vm435, 1e+10, %v383
    %v452 = vsel %vm436, 1e+10, %v384
    %v453 = vsel %vm437, 1e+10, %v385
    %v454 = vsel %vm438, 1e+10, %v386
    %v455 = vsel %vm439, 1e+10, %v387
    %v456 = vsel %vm440, 1e+10, %v388
    %v457 = vsel %vm441, 1e+10, %v389
    %v458 = vsel %vm442, 1e+10, %v390
    %v459 = vsel %vm443, 1e+10, %v391
    %v460 = vsel %vm444, 1e+10, %v392
    %v461 = vsel %vm445, 1e+10, %v393
    %v462 = vsel %vm446, 1e+10, %v394
    %v463 = vsel %vm447, 1e+10, %v395
    %464 = vmin.xlane.f32.xlu0 %v448
    %v465 = vpop.xlane.xlu0 %464
    %466 = vmin.xlane.f32.xlu0 %v449
    %v467 = vpop.xlane.xlu0 %466
    %468 = vmin.xlane.f32.xlu0 %v450
    %v469 = vpop.xlane.xlu0 %468
    %470 = vmin.xlane.f32.xlu0 %v451
    %v471 = vpop.xlane.xlu0 %470
    %472 = vmin.xlane.f32.xlu0 %v452
    %v473 = vpop.xlane.xlu0 %472
    %474 = vmin.xlane.f32.xlu0 %v453
    %v475 = vpop.xlane.xlu0 %474
    %476 = vmin.xlane.f32.xlu0 %v454
    %v477 = vpop.xlane.xlu0 %476
    %478 = vmin.xlane.f32.xlu0 %v455
    %v479 = vpop.xlane.xlu0 %478
    %480 = vmin.xlane.f32.xlu0 %v456
    %v481 = vpop.xlane.xlu0 %480
    %482 = vmin.xlane.f32.xlu0 %v457
    %v483 = vpop.xlane.xlu0 %482
    %484 = vmin.xlane.f32.xlu0 %v458
    %v485 = vpop.xlane.xlu0 %484
    %486 = vmin.xlane.f32.xlu0 %v459
    %v487 = vpop.xlane.xlu0 %486
    %488 = vmin.xlane.f32.xlu0 %v460
    %v489 = vpop.xlane.xlu0 %488
    %490 = vmin.xlane.f32.xlu0 %v461
    %v491 = vpop.xlane.xlu0 %490
    %492 = vmin.xlane.f32.xlu0 %v462
    %v493 = vpop.xlane.xlu0 %492
    %494 = vmin.xlane.f32.xlu0 %v463
    %v495 = vpop.xlane.xlu0 %494
    %vm496 = vcmp.lt.s32.totalorder %v414, 128
    %vm497 = vcmp.lt.s32.totalorder %v415, 128
    %vm498 = vcmp.lt.s32.totalorder %v416, 128
    %vm499 = vcmp.lt.s32.totalorder %v417, 128
    %vm500 = vcmp.lt.s32.totalorder %v418, 128
    %vm501 = vcmp.lt.s32.totalorder %v419, 128
    %vm502 = vcmp.lt.s32.totalorder %v420, 128
    %vm503 = vcmp.lt.s32.totalorder %v421, 128
    %vm504 = vcmp.lt.s32.totalorder %v422, 128
    %vm505 = vcmp.lt.s32.totalorder %v423, 128
    %vm506 = vcmp.lt.s32.totalorder %v424, 128
    %vm507 = vcmp.lt.s32.totalorder %v425, 128
    %vm508 = vcmp.lt.s32.totalorder %v426, 128
    %vm509 = vcmp.lt.s32.totalorder %v427, 128
    %vm510 = vcmp.lt.s32.totalorder %v428, 128
    %vm511 = vcmp.lt.s32.totalorder %v429, 128
    %v512 = vsel %vm496, %v465, -1.0
    %v513 = vsel %vm497, %v467, -1.0
    %v514 = vsel %vm498, %v469, -1.0
    %v515 = vsel %vm499, %v471, -1.0
    %v516 = vsel %vm500, %v473, -1.0
    %v517 = vsel %vm501, %v475, -1.0
    %v518 = vsel %vm502, %v477, -1.0
    %v519 = vsel %vm503, %v479, -1.0
    %v520 = vsel %vm504, %v481, -1.0
    %v521 = vsel %vm505, %v483, -1.0
    %v522 = vsel %vm506, %v485, -1.0
    %v523 = vsel %vm507, %v487, -1.0
    %v524 = vsel %vm508, %v489, -1.0
    %v525 = vsel %vm509, %v491, -1.0
    %v526 = vsel %vm510, %v493, -1.0
    %v527 = vsel %vm511, %v495, -1.0
    %v528 = vmax.f32 %v512, %v516
    %v529 = vmax.f32 %v513, %v517
    %v530 = vmax.f32 %v514, %v518
    %v531 = vmax.f32 %v515, %v519
    %v532 = vmax.f32 %v528, %v520
    %v533 = vmax.f32 %v529, %v521
    %v534 = vmax.f32 %v530, %v522
    %v535 = vmax.f32 %v531, %v523
    %v536 = vmax.f32 %v532, %v524
    %v537 = vmax.f32 %v533, %v525
    %v538 = vmax.f32 %v534, %v526
    %v539 = vmax.f32 %v535, %v527
    %v540 = vmax.f32 %v536, %v537
    %v541 = vmax.f32 %v538, %v539
    %v542 = vmax.f32 %v540, %v541
    %v543 = vrot.slane %v542, 4
    %v544 = vmax.f32 %v542, %v543
    %v545 = vrot.slane %v544, 2
    %v546 = vmax.f32 %v544, %v545
    %v547 = vrot.slane %v546, 1
    %v548 = vmax.f32 %v546, %v547
    %s549 = vtos %v548
    %v550 = vstv %s549
    %551 = vst [vmem:[#allocation2] sm:$0xff] %v550
    // Predicated region
    $region10: #{tpu_custom_call.1} parent=1 // pred_check
      _
    $region11: #{tpu_custom_call.1} parent=1 // pred_check_branch
      %553 = sbr.rel (0) target = $region13
    $region12: #{tpu_custom_call.1} parent=1 // pred_region
      %s555 = ssub.s32 128, 128
      %556 = vsyncadd [#allocation3], %s555
      %s558 = sshll.u32 [#allocation2], 4
      %s559 = int_to_ptr.vmem [resolvable:$true] %s558
      %561 = dma.vmem_to_hbm [thread:$0]  %s559, 128, %s2, [#allocation3]
    $region13: #{tpu_custom_call.1} parent=1 // pred_fallthru
      _
    // Predicated region
    $region14: #{tpu_custom_call.1} parent=1 // pred_check
      _
    $region15: #{tpu_custom_call.1} parent=1 // pred_check_branch
      %563 = sbr.rel (0) target = $region17
    $region16: #{tpu_custom_call.1} parent=1 // pred_region
      %564 = dma.done [#allocation3], 128
    $region17: #{tpu_custom_call.1} parent=1 // pred_fallthru
      _
    %565 = vsyncpa [#allocation3], 1

</llo_original>
